<compile_context>
chip_gen: v6e
topology: v6e:2x2x1
jax: 0.10.0
libtpu: 0.0.40
codegen_flags: <defaults>
</compile_context>

<pallas_src>
import numpy as np
import jax
import jax.numpy as jnp
from jax.experimental import pallas as pl
from jax.experimental.pallas import tpu as pltpu


# ----------------------------------------------------------------------------
# sin/cos positional embeddings (numpy, identical to the reference code)
# ----------------------------------------------------------------------------
def get_1d_sincos_pos_embed_from_grid(embed_dim, pos):
    if embed_dim % 2 != 0:
        raise ValueError("embed_dim must be even")
    omega = np.arange(embed_dim // 2, dtype=float)
    omega /= embed_dim / 2.0
    omega = 1.0 / 10000 ** omega
    pos = pos.reshape(-1)
    out = np.einsum("m,d->md", pos, omega)
    emb_sin = np.sin(out)
    emb_cos = np.cos(out)
    return np.concatenate([emb_sin, emb_cos], axis=1)


def get_2d_sincos_pos_embed_from_grid(embed_dim, grid):
    if embed_dim % 2 != 0:
        raise ValueError("embed_dim must be even")
    emb_h = get_1d_sincos_pos_embed_from_grid(embed_dim // 2, grid[0])
    emb_w = get_1d_sincos_pos_embed_from_grid(embed_dim // 2, grid[1])
    return np.concatenate([emb_h, emb_w], axis=1)


def get_2d_sincos_pos_embed(embed_dim, grid_h_size, grid_w_size, add_cls_token=False):
    grid_h = np.arange(grid_h_size, dtype=np.float32)
    grid_w = np.arange(grid_w_size, dtype=np.float32)
    grid = np.meshgrid(grid_w, grid_h)
    grid = np.stack(grid, axis=0)
    grid = grid.reshape([2, 1, grid_h_size, grid_w_size])
    pos_embed = get_2d_sincos_pos_embed_from_grid(embed_dim, grid)
    if add_cls_token:
        pos_embed = np.concatenate([np.zeros([1, embed_dim]), pos_embed], axis=0)
    return pos_embed


# ----------------------------------------------------------------------------
# helpers
# ----------------------------------------------------------------------------
def _round_up(x, m):
    return (x + m - 1) // m * m


def _largest_tile(dim, granule, max_tile):
    """Largest divisor of `dim` that is a multiple of `granule`, capped at
    `max_tile`.  `dim` must itself be a multiple of `granule`."""
    best = granule
    d = granule
    cap = min(dim, max_tile)
    while d <= cap:
        if dim % d == 0:
            best = d
        d += granule
    return best


def _to_patches(x, ph, pw):
    """NCHW (B,C,H,W) -> (B, P, C*ph*pw) with (c, ph, pw) flatten order."""
    B, C, H, W = x.shape
    gh, gw = H // ph, W // pw
    x = x.reshape(B, C, gh, ph, gw, pw)
    x = jnp.transpose(x, (0, 2, 4, 1, 3, 5))        # (B, gh, gw, C, ph, pw)
    return x.reshape(B, gh * gw, C * ph * pw)


# ----------------------------------------------------------------------------
# Pallas kernels: tiled (M,K)x(K,N) matmul with fused (pos + bias) epilogue
# ----------------------------------------------------------------------------
def _patch_embed_kernel_single_k(a_ref, w_ref, pos_ref, out_ref):
    # Whole K fits in one tile: no accumulator scratch needed.
    out_ref[...] = (jnp.dot(a_ref[...], w_ref[...],
                            preferred_element_type=jnp.float32)
                    + pos_ref[...]).astype(out_ref.dtype)


def _patch_embed_kernel_ksplit(a_ref, w_ref, pos_ref, out_ref, acc_ref):
    # a_ref: (tm, tk) bf16   w_ref: (tk, tn) bf16   pos_ref: (tm, tn) f32
    # out_ref: (tm, tn) f32  acc_ref: (tm, tn) f32 scratch
    k = pl.program_id(2)

    @pl.when(k == 0)
    def _():
        acc_ref[...] = jnp.zeros_like(acc_ref)

    acc_ref[...] += jnp.dot(a_ref[...], w_ref[...],
                            preferred_element_type=jnp.float32)

    @pl.when(k == pl.num_programs(2) - 1)
    def _():
        out_ref[...] = (acc_ref[...] + pos_ref[...]).astype(out_ref.dtype)


def patch_embed_with_pos(patches, w_prepped, posb_prepped, hidden_size):
    """patches: (B,P,K) float; w_prepped: (Kpad,Hpad) bf16 (zero-padded weight);
    posb_prepped: (Ppad,Hpad) f32 (pos + bias, zero-padded).
    Returns (B, P, hidden_size) f32."""
    B, P, K = patches.shape
    Kpad, Hpad = w_prepped.shape
    P_pad = posb_prepped.shape[0]
    M = B * P_pad

    # A operand: (M, Kpad) bf16, zero-padded along P and K (zeros contribute
    # nothing to the matmul; padded P rows are sliced away afterwards).
    a = patches.astype(jnp.bfloat16)
    if P_pad != P or Kpad != K:
        a = jnp.pad(a, ((0, 0), (0, P_pad - P), (0, Kpad - K)))
    a = a.reshape(M, Kpad)

    # Largest hardware-aligned tiles: tm multiple of 8 (sublanes) dividing the
    # per-image patch count so the pos block can be indexed with i % bpb;
    # tn / tk multiples of 128 (lanes / MXU contraction).
    tm = _largest_tile(P_pad, 8, 256)
    tn = _largest_tile(Hpad, 128, 256)
    tk = _largest_tile(Kpad, 128, 1024)
    bpb = P_pad // tm        # M-blocks per batch element (pos repeats every bpb)
    nk = Kpad // tk

    cost = pl.CostEstimate(
        flops=2 * M * Kpad * Hpad,
        transcendentals=0,
        bytes_accessed=(M * Kpad * 2 + Kpad * Hpad * 2
                        + P_pad * Hpad * 4 + M * Hpad * 4),
    )

    if nk == 1:
        # Common case for patch embeddings (K = C*ph*pw is small): single-shot
        # kernel, no accumulator scratch, no reduction grid axis.
        out = pl.pallas_call(
            _patch_embed_kernel_single_k,
            out_shape=jax.ShapeDtypeStruct((M, Hpad), jnp.float32),
            grid_spec=pltpu.PrefetchScalarGridSpec(
                num_scalar_prefetch=0,
                grid=(M // tm, Hpad // tn),
                in_specs=[
                    pl.BlockSpec((tm, Kpad), lambda i, j: (i, 0)),        # A
                    pl.BlockSpec((Kpad, tn), lambda i, j: (0, j)),        # W
                    pl.BlockSpec((tm, tn), lambda i, j: (i % bpb, j)),    # pos+bias
                ],
                out_specs=pl.BlockSpec((tm, tn), lambda i, j: (i, j)),
            ),
            compiler_params=pltpu.CompilerParams(
                dimension_semantics=("parallel", "parallel")),
            cost_estimate=cost,
        )(a, w_prepped, posb_prepped)
    else:
        out = pl.pallas_call(
            _patch_embed_kernel_ksplit,
            out_shape=jax.ShapeDtypeStruct((M, Hpad), jnp.float32),
            grid_spec=pltpu.PrefetchScalarGridSpec(
                num_scalar_prefetch=0,
                grid=(M // tm, Hpad // tn, nk),
                in_specs=[
                    pl.BlockSpec((tm, tk), lambda i, j, k: (i, k)),        # A
                    pl.BlockSpec((tk, tn), lambda i, j, k: (k, j)),        # W
                    pl.BlockSpec((tm, tn), lambda i, j, k: (i % bpb, j)),  # pos+bias
                ],
                out_specs=pl.BlockSpec((tm, tn), lambda i, j, k: (i, j)),
                scratch_shapes=[pltpu.VMEM((tm, tn), jnp.float32)],
            ),
            compiler_params=pltpu.CompilerParams(
                dimension_semantics=("parallel", "parallel", "arbitrary")),
            cost_estimate=cost,
        )(a, w_prepped, posb_prepped)

    out = out.reshape(B, P_pad, Hpad)
    return out[:, :P, :hidden_size]


# ----------------------------------------------------------------------------
# DFFEmbeddings (parameters + forward), mirroring the PyTorch module
# ----------------------------------------------------------------------------
class DFFEmbeddingsJax:
    def __init__(self, *, image_size, patch_size, num_channels, hidden_size,
                 mask_ratio, initializer_range, key):
        self.image_size = (image_size, image_size)
        self.patch_size = (patch_size, patch_size)
        self.num_channels = num_channels
        self.hidden_size = hidden_size
        self.mask_ratio = mask_ratio

        gh = self.image_size[0] // self.patch_size[0]
        gw = self.image_size[1] // self.patch_size[1]
        self.grid_h, self.grid_w = gh, gw
        P = gh * gw
        self.num_filtration_para = P

        k_w, k_b, k_cls = jax.random.split(key, 3)
        K = num_channels * patch_size * patch_size

        # Conv2d weight, xavier_uniform on the (hidden, K) view (as in initialize_weights)
        bound = float(np.sqrt(6.0 / (K + hidden_size)))
        w_view = jax.random.uniform(k_w, (hidden_size, K), jnp.float32, -bound, bound)
        self.w_mat = jnp.transpose(w_view)                      # (K, hidden) f32

        # Conv2d bias: torch default uniform(-1/sqrt(fan_in), 1/sqrt(fan_in))
        b_bound = 1.0 / float(np.sqrt(K))
        self.bias = jax.random.uniform(k_b, (1, hidden_size), jnp.float32,
                                       -b_bound, b_bound)

        # CLS token: normal(0, initializer_range)
        self.cls_token = (initializer_range *
                          jax.random.normal(k_cls, (1, 1, hidden_size), jnp.float32))

        # Fixed sin/cos filtration (position) embeddings, (1, P+1, hidden)
        pos = get_2d_sincos_pos_embed(hidden_size, gh, gw, add_cls_token=True)
        self.filtration_embeddings = jnp.asarray(pos, jnp.float32)[None, :, :]

        # ---- kernel operands prepared once (pad to hardware-aligned shapes) ----
        Kpad = _round_up(K, 128)
        Hpad = _round_up(hidden_size, 128)
        P_pad = _round_up(P, 8)
        # Weight fed to the MXU as bf16, zero-padded to (Kpad, Hpad).
        w_padded = (jnp.zeros((Kpad, Hpad), jnp.float32)
                    .at[:K, :hidden_size].set(self.w_mat))
        self.w_prepped = w_padded.astype(jnp.bfloat16)
        # Bias folded into the patch positional embeddings (f32, padded lanes/rows).
        posb = self.filtration_embeddings[0, 1:, :] + self.bias          # (P, hidden)
        self.posb_prepped = (jnp.zeros((P_pad, Hpad), jnp.float32)
                             .at[:P, :hidden_size].set(posb))

        # Jit the whole forward so patchify + padding + bf16 cast fuse into the
        # producer of the kernel's A operand (no extra f32 HBM round trip).
        self._forward_jit = jax.jit(self._forward_impl)

    def random_masking(self, sequence, noise):
        # TODO(synk): argsort/gather random masking is data-dependent; kept in plain JAX.
        B, P, D = sequence.shape
        len_keep = int(P * (1 - self.mask_ratio))
        ids_shuffle = jnp.argsort(noise, axis=1)
        ids_restore = jnp.argsort(ids_shuffle, axis=1)
        ids_keep = ids_shuffle[:, :len_keep]
        seq_unmasked = jnp.take_along_axis(sequence, ids_keep[:, :, None], axis=1)
        mask = jnp.ones((B, P), jnp.float32)
        mask = mask.at[:, :len_keep].set(0.0)
        mask = jnp.take_along_axis(mask, ids_restore, axis=1)
        return seq_unmasked, mask, ids_restore

    def _forward_impl(self, topological_features, noise):
        B = topological_features.shape[0]
        ph, pw = self.patch_size
        patches = _to_patches(topological_features, ph, pw)        # (B, P, K)

        # Hot path: flattened tiled matmul + fused (pos + bias) add in Pallas.
        embeddings = patch_embed_with_pos(patches, self.w_prepped,
                                          self.posb_prepped, self.hidden_size)

        # Data-dependent masking / gather done in plain JAX (glue).
        embeddings, mask, ids_restore = self.random_masking(embeddings, noise)

        cls_token = self.cls_token + self.filtration_embeddings[:, :1, :]  # (1,1,H)
        cls_tokens = jnp.broadcast_to(cls_token, (B, 1, self.hidden_size))
        embeddings = jnp.concatenate([cls_tokens, embeddings], axis=1)
        return embeddings, mask, ids_restore

    def forward(self, topological_features, noise):
        B, C, H, W = topological_features.shape
        assert C == self.num_channels
        assert (H, W) == self.image_size
        return self._forward_jit(topological_features, noise)


# ----------------------------------------------------------------------------
# main
# ----------------------------------------------------------------------------
if __name__ == "__main__":
    # Small config: image 16x16, patch 4 -> 16 patches, 4 channels, hidden 32.
    B, C, IMG, PATCH, HID = 2, 4, 16, 4, 32
    MASK_RATIO, INIT_RANGE = 0.75, 0.02

    key = jax.random.PRNGKey(0)
    k_param, k_x, k_noise = jax.random.split(key, 3)

    module = DFFEmbeddingsJax(image_size=IMG, patch_size=PATCH, num_channels=C,
                              hidden_size=HID, mask_ratio=MASK_RATIO,
                              initializer_range=INIT_RANGE, key=k_param)

    x = jax.random.normal(k_x, (B, C, IMG, IMG), jnp.float32)
    noise = jax.random.uniform(k_noise, (B, module.num_filtration_para), jnp.float32)

    embeddings, mask, ids_restore = module.forward(x, noise)
    jax.block_until_ready((embeddings, mask, ids_restore))

    # Reference check of the kernel hot path against a high-precision f32
    # einsum on the SAME bf16-rounded operands the MXU sees.
    patches_ref = _to_patches(x, PATCH, PATCH)                    # (B, P, K) f32
    K = C * PATCH * PATCH
    a_bf = patches_ref.astype(jnp.bfloat16).astype(jnp.float32)
    w_bf = module.w_prepped[:K, :HID].astype(jnp.float32)
    ref = (jnp.einsum("bpk,kh->bph", a_bf, w_bf,
                      precision=jax.lax.Precision.HIGHEST)
           + module.bias[None] + module.filtration_embeddings[:, 1:, :])
    kernel_out = patch_embed_with_pos(patches_ref, module.w_prepped,
                                      module.posb_prepped, HID)
    np.testing.assert_allclose(np.asarray(kernel_out), np.asarray(ref),
                               rtol=1e-4, atol=1e-4)

    len_keep = int(module.num_filtration_para * (1 - MASK_RATIO))
    assert embeddings.shape == (B, 1 + len_keep, HID)
    assert mask.shape == (B, module.num_filtration_para)
    assert ids_restore.shape == (B, module.num_filtration_para)

    print("KERNEL_OK")
</pallas_src>

<mosaic_0001>
module attributes {stable_mosaic.version = 11 : i64} {
  func.func @_patch_embed_kernel_single_k(%arg0: i32, %arg1: i32, %arg2: memref<16x128xbf16, #tpu.memory_space<vmem>>, %arg3: memref<128x128xbf16, #tpu.memory_space<vmem>>, %arg4: memref<16x128xf32, #tpu.memory_space<vmem>>, %arg5: memref<16x128xf32, #tpu.memory_space<vmem>>) attributes {dimension_semantics = [#tpu.dimension_semantics<parallel>, #tpu.dimension_semantics<parallel>], iteration_bounds = array<i64: 2, 1>, scalar_prefetch = 0 : i64, scratch_operands = 0 : i64, tpu.core_type = #tpu.core_type<tc>, window_params = [{transform_indices = @transform_0, window_bounds = array<i64: 16, 128>}, {transform_indices = @transform_1, window_bounds = array<i64: 128, 128>}, {transform_indices = @transform_2, window_bounds = array<i64: 16, 128>}, {transform_indices = @transform_3, window_bounds = array<i64: 16, 128>}]} {
    %c0 = arith.constant 0 : index
    %c0_0 = arith.constant 0 : index
    %0 = vector.load %arg2[%c0, %c0_0] : memref<16x128xbf16, #tpu.memory_space<vmem>>, vector<16x128xbf16>
    %c0_1 = arith.constant 0 : index
    %c0_2 = arith.constant 0 : index
    %1 = vector.load %arg3[%c0_1, %c0_2] : memref<128x128xbf16, #tpu.memory_space<vmem>>, vector<128x128xbf16>
    %cst = arith.constant dense<0.000000e+00> : vector<16x128xf32>
    %2 = tpu.matmul %0, %1, %cst {dimension_numbers = #tpu.dot_dimension_numbers<[1], [0], [0], [1], [0, 0, 1, 1], [], []>} : vector<16x128xbf16>, vector<128x128xbf16>, vector<16x128xf32> -> vector<16x128xf32>
    %c0_3 = arith.constant 0 : index
    %c0_4 = arith.constant 0 : index
    %3 = vector.load %arg4[%c0_3, %c0_4] : memref<16x128xf32, #tpu.memory_space<vmem>>, vector<16x128xf32>
    %4 = arith.addf %2, %3 : vector<16x128xf32>
    %c0_5 = arith.constant 0 : index
    %c0_6 = arith.constant 0 : index
    %5 = vector.load %arg5[%c0_5, %c0_6] : memref<16x128xf32, #tpu.memory_space<vmem>>, vector<16x128xf32>
    tpu.vector_store %arg5[%c0_5, %c0_6], %4 {strides = array<i32>} : memref<16x128xf32, #tpu.memory_space<vmem>>, vector<16x128xf32>,
    return
  }
  func.func @transform_0(%arg0: i32, %arg1: i32) -> (i32, i32) {
    %c0_i32 = arith.constant 0 : i32
    %c0_i32_0 = arith.constant 0 : i32
    return %arg0, %c0_i32 : i32, i32
  }
  func.func @transform_1(%arg0: i32, %arg1: i32) -> (i32, i32) {
    %c0_i32 = arith.constant 0 : i32
    %c0_i32_0 = arith.constant 0 : i32
    return %c0_i32, %arg1 : i32, i32
  }
  func.func @transform_2(%arg0: i32, %arg1: i32) -> (i32, i32) {
    %c1_i32 = arith.constant 1 : i32
    %c0_i32 = arith.constant 0 : i32
    %0 = arith.cmpi eq, %c1_i32, %c0_i32 : i32
    %c1_i32_0 = arith.constant 1 : i32
    %1 = arith.select %0, %c1_i32_0, %c1_i32 : i32
    %2 = arith.remsi %arg0, %1 : i32
    %c0_i32_1 = arith.constant 0 : i32
    %3 = arith.cmpi ne, %2, %c0_i32_1 : i32
    %c0_i32_2 = arith.constant 0 : i32
    %4 = arith.cmpi slt, %2, %c0_i32_2 : i32
    %c0_i32_3 = arith.constant 0 : i32
    %5 = arith.cmpi slt, %1, %c0_i32_3 : i32
    %6 = arith.xori %4, %5 : i1
    %7 = arith.andi %6, %3 : i1
    %8 = arith.addi %2, %1 : i32
    %9 = arith.select %7, %8, %2 : i32
    %c0_i32_4 = arith.constant 0 : i32
    return %9, %arg1 : i32, i32
  }
  func.func @transform_3(%arg0: i32, %arg1: i32) -> (i32, i32) {
    %c0_i32 = arith.constant 0 : i32
    return %arg0, %arg1 : i32, i32
  }
}

</mosaic_0001>

<llo_original>
// kernel: _forward_impl.1
$region0: #{_forward_impl.1}
  #allocation0 [shape = 'u32[]', space=smem, size = 0x4, offset = 0x4, fixed_abs, tag = 'smem constant byte address 0x4 - core index']
  #allocation1 [shape = 'u32[144,128]{1,0:T(1,128)}', space=vmem, size = 0x12000, scoped, tag = 'internal scratch']
  %s0 = inlined_call_operand.vmem [shape: bf16[32,128], index: 0, kind: input, shape index: {}]
  %s1 = inlined_call_operand.vmem [shape: bf16[128,128], index: 1, kind: input, shape index: {}]
  %s2 = inlined_call_operand.vmem [shape: f32[16,128], index: 2, kind: input, shape index: {}]
  %s3 = inlined_call_operand.vmem [shape: f32[32,128], index: 3, kind: output, shape index: {}]
  %s4 = sld [smem:[#allocation0]]
  $region45: #{_forward_impl.1} parent=0
    _
  %s6 = ssub.s32 1, %s4
  %s7 = scalar_select 0, %s6, %s4
  loop: start=0, step=1, limit=4
  $region2: #{_forward_impl.1} parent=0 // loop_pre_header
    _
  $region3: #{_forward_impl.1} parent=0 // loop_header
    %s9 = sphi 0, %s13
    %p10 = scmp.ge.s32.totalorder %s9, 4
    %s16 = sphi 0, %s28
    %s17 = sphi 0, %s24
    %s18 = sphi 0, %s16
    %s19 = sphi 0, %s17
    %s20 = sphi 0, %s18
    %s21 = sphi 0, %s19
    %s31 = sphi 0, %s33
    %s34 = sphi 0, %s31
    %s35 = sphi 0, %s34
    %s51 = sphi 0, %s35
    %s57 = sphi 0, %s59
    %s60 = sphi 0, %s57
    %s61 = sphi 0, %s60
    %s77 = sphi 0, %s61
    %s83 = sphi 0, %s85
    %s86 = sphi 0, %s83
    %s87 = sphi 0, %s86
    %s103 = sphi 0, %s87
    %s111 = sphi 0, %s113
    %s114 = sphi 0, %s111
    %s115 = sphi 0, %s114
    %s131 = sphi 0, %s115
  $region4: #{_forward_impl.1} parent=0 // loop_header_branch
    %12 = sbr.rel (%p10) target = $region8
  $region5: #{_forward_impl.1} parent=0 // loop_body
    %s14 = ssub.s32 %s9, 1
    %s15 = ssub.s32 %s9, 2
    %s22 = sadd.s32 1, %s17
    %p23 = scmp.ge.s32.totalorder %s22, 1
    %s24 = scalar_select %p23, 0, %s22
    %s25 = sadd.s32 1, %s16
    %s26 = scalar_select %p23, %s25, %s16
    %p27 = scmp.ge.s32.totalorder %s26, 2
    %s28 = scalar_select %p27, 0, %s26
    %s29 = ssub.s32 %s16, %s28
    %p30 = scmp.eq.s32.totalorder %s29, 0
    %s32 = sadd.s32 %s31, 1
    %s33 = scalar_select %p30, %s31, %s32
    %p36 = pneg %p30
    %p37 = scmp.eq.s32.totalorder %s9, 1
    %p38 = por %p36, %p37
    %p39 = scmp.ne.s32.totalorder %s31, %s34
    %p40 = scmp.eq.s32.totalorder %s9, 0
    %p41 = por %p39, %p40
    %p42 = scmp.ne.s32.totalorder %s31, %s34
    %p43 = scmp.eq.s32.totalorder %s14, 1
    %p44 = por %p42, %p43
    %p45 = scmp.ne.s32.totalorder %s34, %s35
    %p46 = scmp.eq.s32.totalorder %s14, 0
    %p47 = por %p45, %p46
    %p48 = scmp.ne.s32.totalorder %s34, %s35
    %p49 = scmp.eq.s32.totalorder %s15, 1
    %p50 = por %p48, %p49
    %p52 = scmp.ne.s32.totalorder %s35, %s51
    %p53 = scmp.eq.s32.totalorder %s15, 0
    %p54 = por %p52, %p53
    %s55 = ssub.s32 %s17, %s24
    %p56 = scmp.eq.s32.totalorder %s55, 0
    %s58 = sadd.s32 %s57, 1
    %s59 = scalar_select %p56, %s57, %s58
    %p62 = pneg %p56
    %p63 = scmp.eq.s32.totalorder %s9, 1
    %p64 = por %p62, %p63
    %p65 = scmp.ne.s32.totalorder %s57, %s60
    %p66 = scmp.eq.s32.totalorder %s9, 0
    %p67 = por %p65, %p66
    %p68 = scmp.ne.s32.totalorder %s57, %s60
    %p69 = scmp.eq.s32.totalorder %s14, 1
    %p70 = por %p68, %p69
    %p71 = scmp.ne.s32.totalorder %s60, %s61
    %p72 = scmp.eq.s32.totalorder %s14, 0
    %p73 = por %p71, %p72
    %p74 = scmp.ne.s32.totalorder %s60, %s61
    %p75 = scmp.eq.s32.totalorder %s15, 1
    %p76 = por %p74, %p75
    %p78 = scmp.ne.s32.totalorder %s61, %s77
    %p79 = scmp.eq.s32.totalorder %s15, 0
    %p80 = por %p78, %p79
    %s81 = ssub.s32 %s17, %s24
    %p82 = scmp.eq.s32.totalorder %s81, 0
    %s84 = sadd.s32 %s83, 1
    %s85 = scalar_select %p82, %s83, %s84
    %p88 = pneg %p82
    %p89 = scmp.eq.s32.totalorder %s9, 1
    %p90 = por %p88, %p89
    %p91 = scmp.ne.s32.totalorder %s83, %s86
    %p92 = scmp.eq.s32.totalorder %s9, 0
    %p93 = por %p91, %p92
    %p94 = scmp.ne.s32.totalorder %s83, %s86
    %p95 = scmp.eq.s32.totalorder %s14, 1
    %p96 = por %p94, %p95
    %p97 = scmp.ne.s32.totalorder %s86, %s87
    %p98 = scmp.eq.s32.totalorder %s14, 0
    %p99 = por %p97, %p98
    %p100 = scmp.ne.s32.totalorder %s86, %s87
    %p101 = scmp.eq.s32.totalorder %s15, 1
    %p102 = por %p100, %p101
    %p104 = scmp.ne.s32.totalorder %s87, %s103
    %p105 = scmp.eq.s32.totalorder %s15, 0
    %p106 = por %p104, %p105
    %s107 = ssub.s32 %s16, %s28
    %s108 = ssub.s32 %s17, %s24
    %s109 = sor.u32 %s107, %s108
    %p110 = scmp.eq.s32.totalorder %s109, 0
    %s112 = sadd.s32 %s111, 1
    %s113 = scalar_select %p110, %s111, %s112
    %p116 = pneg %p110
    %p117 = scmp.eq.s32.totalorder %s9, 1
    %p118 = por %p116, %p117
    %p119 = scmp.ne.s32.totalorder %s111, %s114
    %p120 = scmp.eq.s32.totalorder %s9, 0
    %p121 = por %p119, %p120
    %p122 = scmp.ne.s32.totalorder %s111, %s114
    %p123 = scmp.eq.s32.totalorder %s14, 1
    %p124 = por %p122, %p123
    %p125 = scmp.ne.s32.totalorder %s114, %s115
    %p126 = scmp.eq.s32.totalorder %s14, 0
    %p127 = por %p125, %p126
    %p128 = scmp.ne.s32.totalorder %s114, %s115
    %p129 = scmp.eq.s32.totalorder %s15, 1
    %p130 = por %p128, %p129
    %p132 = scmp.ne.s32.totalorder %s115, %s131
    %p133 = scmp.eq.s32.totalorder %s15, 0
    %p134 = por %p132, %p133
    %p135 = scmp.le.s32.totalorder 1, %s9
    %p136 = scmp.lt.s32.totalorder %s9, 3
    %p137 = pnand %p135, %p136
    %p138 = pneg %p137
    // Predicated region
    $region9: #{_forward_impl.1} parent=5 // pred_check
      _
    $region10: #{_forward_impl.1} parent=5 // pred_check_branch
      %140 = sbr.rel (%p137) target = $region12
    $region11: #{_forward_impl.1} parent=5 // pred_region
      %s141 = ssub.s32 %s9, 1
      // Predicated region
      $region13: #{_forward_impl.1} parent=11 // pred_check
        %p142 = pneg %p73
      $region14: #{_forward_impl.1} parent=11 // pred_check_branch
        %144 = sbr.rel (%p142) target = $region16
      $region15: #{_forward_impl.1} parent=11 // pred_region
        %p145 = scmp.lt.s32.totalorder %s19, 0
        %s146 = scalar_select %p145, %s19, 0
        %s147 = smul.addr %s146, 4
        %s148 = scalar_lea.vmem %s1, %s147
      $region16: #{_forward_impl.1} parent=11 // pred_fallthru
        _
      // Predicated region
      $region17: #{_forward_impl.1} parent=11 // pred_check
        %p149 = pneg %p99
      $region18: #{_forward_impl.1} parent=11 // pred_check_branch
        %151 = sbr.rel (%p149) target = $region20
      $region19: #{_forward_impl.1} parent=11 // pred_region
        %p152 = scmp.lt.s32.totalorder %s19, 0
        %s153 = scalar_select %p152, %s19, 0
        %s154 = smul.addr %s153, 8
        %s155 = scalar_lea.vmem %s2, %s154
      $region20: #{_forward_impl.1} parent=11 // pred_fallthru
        _
    $region12: #{_forward_impl.1} parent=5 // pred_fallthru
      _
    %p156 = scmp.lt.s32.totalorder %s9, 2
    // Predicated region
    $region21: #{_forward_impl.1} parent=5 // pred_check
      %p157 = pneg %p156
    $region22: #{_forward_impl.1} parent=5 // pred_check_branch
      %159 = sbr.rel (%p157) target = $region24
    $region23: #{_forward_impl.1} parent=5 // pred_region
      // Predicated region
      $region25: #{_forward_impl.1} parent=23 // pred_check
        %p160 = pneg %p41
      $region26: #{_forward_impl.1} parent=23 // pred_check_branch
        %162 = sbr.rel (%p160) target = $region28
      $region27: #{_forward_impl.1} parent=23 // pred_region
        %s163 = smul.u32 2, %s16
        %p164 = scmp.lt.s32.totalorder %s163, 3
        %s165 = scalar_select %p164, %s163, 3
        %s166 = smul.addr %s165, 4
        %s167 = scalar_lea.vmem %s0, %s166
        %s168 = smul.u32 2, %s16
      $region28: #{_forward_impl.1} parent=23 // pred_fallthru
        _
    $region24: #{_forward_impl.1} parent=5 // pred_fallthru
      _
    %p169 = scmp.le.s32.totalorder 1, %s9
    %p170 = scmp.lt.s32.totalorder %s9, 3
    %p171 = pnand %p169, %p170
    %p172 = pneg %p171
    // Predicated region
    $region29: #{_forward_impl.1} parent=5 // pred_check
      _
    $region30: #{_forward_impl.1} parent=5 // pred_check_branch
      %174 = sbr.rel (%p171) target = $region32
    $region31: #{_forward_impl.1} parent=5 // pred_region
      %s175 = ssub.s32 %s9, 1
      %s176 = smul.u32 2, %s18
      %p177 = scmp.lt.s32.totalorder %s176, 3
      %s178 = scalar_select %p177, %s176, 3
      %s179 = smul.addr %s178, 4
      %s180 = scalar_lea.vmem %s0, %s179
      %p181 = pneg %p47
      %p182 = pneg %p44
      %p183 = scmp.lt.s32.totalorder %s19, 0
      %s184 = scalar_select %p183, %s19, 0
      %s185 = smul.addr %s184, 4
      %s186 = scalar_lea.vmem %s1, %s185
      %p187 = pneg %p73
      %p188 = pneg %p70
      %p189 = scmp.lt.s32.totalorder %s19, 0
      %s190 = scalar_select %p189, %s19, 0
      %s191 = smul.addr %s190, 8
      %s192 = scalar_lea.vmem %s2, %s191
      %p193 = pneg %p99
      %p194 = pneg %p96
      %p195 = pneg %p127
      %p196 = pneg %p124
      %s197 = smul.u32 2, %s18
      %p198 = scmp.lt.s32.totalorder %s197, 3
      %s199 = scalar_select %p198, %s197, 3
      %p200 = scmp.lt.s32.totalorder %s19, 0
      %s201 = scalar_select %p200, %s19, 0
      %s202 = sadd.s32 %s201, %s199
      %s203 = smul.addr %s202, 8
      %s204 = scalar_lea.vmem %s3, %s203
      %s205 = smul.u32 2, %s18
      %p206 = scmp.lt.s32.totalorder %s205, 3
      %s207 = scalar_select %p206, %s205, 3
      %s208 = smul.addr %s207, 4
      %s209 = scalar_lea.vmem %s0, %s208
      %s210 = smul.u32 2, %s18
      %p211 = scmp.lt.s32.totalorder %s19, 0
      %s212 = scalar_select %p211, %s19, 0
      %s213 = smul.addr %s212, 4
      %s214 = scalar_lea.vmem %s1, %s213
      %p215 = scmp.lt.s32.totalorder %s19, 0
      %s216 = scalar_select %p215, %s19, 0
      %s217 = smul.addr %s216, 8
      %s218 = scalar_lea.vmem %s2, %s217
      %s219 = smul.u32 2, %s18
      %p220 = scmp.lt.s32.totalorder %s219, 3
      %s221 = scalar_select %p220, %s219, 3
      %p222 = scmp.lt.s32.totalorder %s19, 0
      %s223 = scalar_select %p222, %s19, 0
      %s224 = sadd.s32 %s223, %s221
      %s225 = smul.addr %s224, 8
      %s226 = scalar_lea.vmem %s3, %s225
      %s227 = smul.u32 2, %s18
      %v229 = vld [vmem:[%s209] sm:$0xf]
      %v230 = vld [vmem:[%s209 + $0x4] sm:$0xf]
      %v231 = vld [vmem:[%s214] sm:$0xf]
      %v232 = vld [vmem:[%s214 + $0x4] sm:$0xf]
      %v233 = vld [vmem:[%s214 + $0x8] sm:$0xf]
      %v234 = vld [vmem:[%s214 + $0xc] sm:$0xf]
      %v235 = vld [vmem:[%s214 + $0x10] sm:$0xf]
      %v236 = vld [vmem:[%s214 + $0x14] sm:$0xf]
      %v237 = vld [vmem:[%s214 + $0x18] sm:$0xf]
      %v238 = vld [vmem:[%s214 + $0x1c] sm:$0xf]
      %v239 = vld [vmem:[%s214 + $0x20] sm:$0xf]
      %v240 = vld [vmem:[%s214 + $0x24] sm:$0xf]
      %v241 = vld [vmem:[%s214 + $0x28] sm:$0xf]
      %v242 = vld [vmem:[%s214 + $0x2c] sm:$0xf]
      %v243 = vld [vmem:[%s214 + $0x30] sm:$0xf]
      %v244 = vld [vmem:[%s214 + $0x34] sm:$0xf]
      %v245 = vld [vmem:[%s214 + $0x38] sm:$0xf]
      %v246 = vld [vmem:[%s214 + $0x3c] sm:$0xf]
      %v247 = vld [vmem:[%s218] sm:$0xff]
      %v248 = vld [vmem:[%s218 + $0x8] sm:$0xff]
      %v251 = vunpack.c.l.b16 %v229
      %v252 = vunpack.c.l.b16 %v230
      %v253 = vpack.c.b16 %v252, %v251
      %v271 = vunpack.c.l.b16 %v231
      %v272 = vunpack.c.l.b16 %v232
      %v273 = vunpack.c.l.b16 %v233
      %v274 = vunpack.c.l.b16 %v234
      %v275 = vunpack.c.l.b16 %v235
      %v276 = vunpack.c.l.b16 %v236
      %v277 = vunpack.c.l.b16 %v237
      %v278 = vunpack.c.l.b16 %v238
      %v279 = vunpack.c.l.b16 %v239
      %v280 = vunpack.c.l.b16 %v240
      %v281 = vunpack.c.l.b16 %v241
      %v282 = vunpack.c.l.b16 %v242
      %v283 = vunpack.c.l.b16 %v243
      %v284 = vunpack.c.l.b16 %v244
      %v285 = vunpack.c.l.b16 %v245
      %v286 = vunpack.c.l.b16 %v246
      %v287 = vpack.c.b16 %v272, %v271
      %v288 = vpack.c.b16 %v274, %v273
      %v289 = vpack.c.b16 %v276, %v275
      %v290 = vpack.c.b16 %v278, %v277
      %v291 = vpack.c.b16 %v280, %v279
      %v292 = vpack.c.b16 %v282, %v281
      %v293 = vpack.c.b16 %v284, %v283
      %v294 = vpack.c.b16 %v286, %v285
      %303 = vmatprep.subr.bf16.mxu0 0
      %304 = vmatpush1.bf16.msra.mxu0 %v294
      %305 = vmatprep.subr.bf16.mxu0 0
      %306 = vmatpush1.bf16.msra.mxu0 %v293
      %307 = vmatprep.subr.bf16.mxu0 0
      %308 = vmatpush1.bf16.msra.mxu0 %v292
      %309 = vmatprep.subr.bf16.mxu0 0
      %310 = vmatpush1.bf16.msra.mxu0 %v291
      %311 = vmatprep.subr.bf16.mxu0 0
      %312 = vmatpush1.bf16.msra.mxu0 %v290
      %313 = vmatprep.subr.bf16.mxu0 0
      %314 = vmatpush1.bf16.msra.mxu0 %v289
      %315 = vmatprep.subr.bf16.mxu0 0
      %316 = vmatpush1.bf16.msra.mxu0 %v288
      %317 = vmatprep.subr.bf16.mxu0 0
      %318 = vmatpush1.bf16.msra.mxu0 %v287
      %319 = vmatprep.subr.bf16.mxu0 0
      %320 = vmatpush2.bf16.msra.mxu0 0
      %321 = vmatprep.subr.bf16.mxu0 0
      %322 = vmatpush2.bf16.msra.mxu0 0
      %323 = vmatprep.subr.bf16.mxu0 0
      %324 = vmatpush2.bf16.msra.mxu0 0
      %325 = vmatprep.subr.bf16.mxu0 0
      %326 = vmatpush2.bf16.msra.mxu0 0
      %327 = vmatprep.subr.bf16.mxu0 0
      %328 = vmatpush2.bf16.msra.mxu0 0
      %329 = vmatprep.subr.bf16.mxu0 0
      %330 = vmatpush2.bf16.msra.mxu0 0
      %331 = vmatprep.subr.bf16.mxu0 0
      %332 = vmatpush2.bf16.msra.mxu0 0
      %333 = vmatprep.subr.bf16.mxu0 0
      %334 = vmatpush2.bf16.msra.mxu0 0
      %335 = vmatprep.mubr.bf16.mxu0 0
      %336 = vmatmul.mubr.bf16.gmra.mxu0 %v253
      %v337 = vpop.f32.mrf.mxu0
      %v338 = vadd.f32 %v247, %v337
      %v339 = vpop.f32.mrf.mxu0
      %v340 = vpop.f32.mrf.mxu0
      %v341 = vadd.f32 %v248, %v340
      %v342 = vpop.f32.mrf.mxu0
      %343 = vdwg.mxu0
      %344 = vst [vmem:[%s226] sm:$0xff] %v338
      %345 = vst [vmem:[%s226 + $0x8] sm:$0xff] %v341
      %s346 = smul.u32 2, %s18
      %p347 = scmp.lt.s32.totalorder %s346, 3
      %s348 = scalar_select %p347, %s346, 3
      %p349 = scmp.lt.s32.totalorder %s19, 0
      %s350 = scalar_select %p349, %s19, 0
      %s351 = sadd.s32 %s350, %s348
      %s352 = smul.addr %s351, 8
      %s353 = scalar_lea.vmem %s3, %s352
      // Predicated region
      $region33: #{_forward_impl.1} parent=31 // pred_check
        %p354 = pneg %p124
      $region34: #{_forward_impl.1} parent=31 // pred_check_branch
        %356 = sbr.rel (%p354) target = $region36
      $region35: #{_forward_impl.1} parent=31 // pred_region
        %s357 = smul.u32 2, %s18
      $region36: #{_forward_impl.1} parent=31 // pred_fallthru
        _
    $region32: #{_forward_impl.1} parent=5 // pred_fallthru
      _
    %p358 = scmp.le.s32.totalorder 2, %s9
    // Predicated region
    $region37: #{_forward_impl.1} parent=5 // pred_check
      %p359 = pneg %p358
    $region38: #{_forward_impl.1} parent=5 // pred_check_branch
      %361 = sbr.rel (%p359) target = $region40
    $region39: #{_forward_impl.1} parent=5 // pred_region
      %s362 = ssub.s32 %s9, 2
      // Predicated region
      $region41: #{_forward_impl.1} parent=39 // pred_check
        %p363 = pneg %p130
      $region42: #{_forward_impl.1} parent=39 // pred_check_branch
        %365 = sbr.rel (%p363) target = $region44
      $region43: #{_forward_impl.1} parent=39 // pred_region
        %s366 = smul.u32 2, %s20
        %p367 = scmp.lt.s32.totalorder %s366, 3
        %s368 = scalar_select %p367, %s366, 3
        %p369 = scmp.lt.s32.totalorder %s21, 0
        %s370 = scalar_select %p369, %s21, 0
        %s371 = sadd.s32 %s370, %s368
        %s372 = smul.addr %s371, 8
        %s373 = scalar_lea.vmem %s3, %s372
      $region44: #{_forward_impl.1} parent=39 // pred_fallthru
        _
    $region40: #{_forward_impl.1} parent=5 // pred_fallthru
      _
  $region6: #{_forward_impl.1} parent=0 // loop_footer
    %s13 = sadd.s32 1, %s9
  $region7: #{_forward_impl.1} parent=0 // loop_footer_branch
    %8 = sbr.rel target = $region3
  $region8: #{_forward_impl.1} parent=0 // loop_exit
    _

</llo_original>
